<compile_context>
chip_gen: v7x
topology: tpu7x:2x2x1
jax: 0.10.0
libtpu: 0.0.40
codegen_flags: <defaults>
</compile_context>

<pallas_src>
import numpy as np
import jax
import jax.numpy as jnp
from jax.experimental import pallas as pl
from jax.experimental.pallas import tpu as pltpu


# ----------------------------------------------------------------------------
# Icosahedron geometry / permutation buffers (deterministic numpy "glue").
# TODO(synk): vertex ordering comes from a canonical golden-ratio icosahedron
# instead of vgtk's .ply mesh, so the permutation buffers are an internally
# consistent (but not bit-identical) instance of the same construction.
# ----------------------------------------------------------------------------
def _icosahedron():
    phi = (1.0 + np.sqrt(5.0)) / 2.0
    vs = []
    for s1 in (1.0, -1.0):
        for s2 in (phi, -phi):
            vs.append((0.0, s1, s2))
            vs.append((s1, s2, 0.0))
            vs.append((s2, 0.0, s1))
    vs = np.asarray(vs, dtype=np.float64)
    vs /= np.linalg.norm(vs, axis=1, keepdims=True)          # (12, 3)
    dots = vs @ vs.T
    order = np.argsort(-dots, axis=1, kind="stable")
    v_adjs = order[:, 1:6]       # 5 adjacent vertices of each vertex
    v_level2s = order[:, 6:11]   # 5 second-ring vertices
    v_opps = order[:, 11]        # antipodal vertex
    return vs, v_adjs, v_level2s, v_opps


def _frame(v, a):
    e1 = v / np.linalg.norm(v)
    ap = a - np.dot(a, e1) * e1
    e2 = ap / np.linalg.norm(ap)
    e3 = np.cross(e1, e2)
    return np.stack([e1, e2, e3], axis=1)


def _vertex_rotations(vs, v_adjs):
    # R_i maps the directed edge (v0, v0_adj0) onto (v_i, v_i_adj0), hence is
    # an element of the icosahedral rotation group with R_i v0 = v_i.
    F0 = _frame(vs[0], vs[v_adjs[0, 0]])
    Rs = [_frame(vs[i], vs[v_adjs[i, 0]]) @ F0.T for i in range(vs.shape[0])]
    return np.stack(Rs, axis=0)   # (12, 3, 3); Rs[0] == I


def _relativeV12_index():
    vs, v_adjs, v_level2s, v_opps = _icosahedron()
    Rs = _vertex_rotations(vs, v_adjs)
    rotated = np.einsum('dij,aj->dai', Rs, vs)                         # (12,12,3)
    dist = np.linalg.norm(rotated[:, :, None, :] - vs[None, None, :, :], axis=-1)
    trace_idx_ori = np.argmin(dist, axis=2)   # R_d v_a  == v_{ori[d,a]}
    trace_idx_rot = np.argmin(dist, axis=1)   # R_d v_{rot[d,c]} == v_c
    return trace_idx_ori, trace_idx_rot, v_adjs, v_level2s, v_opps


# ----------------------------------------------------------------------------
# Module parameters / index buffers (mirrors BasicS2Conv.__init__)
# ----------------------------------------------------------------------------
def make_basic_s2conv_params(key, dim_in, dim_out, kernel_size=13, anchor_size=12):
    assert kernel_size == 13 and anchor_size == 12
    _, trace_idx_rot, v_adjs, v_level2s, v_opps = _relativeV12_index()
    trace_idxv_rot = np.concatenate(
        [trace_idx_rot, np.full_like(trace_idx_rot[:, :1], 12)], axis=1)   # (12, 13)

    inv_idxs = np.empty(kernel_size, dtype=np.int64)
    inv_idxs[0] = 0
    inv_idxs[v_adjs[0]] = 1
    inv_idxs[v_level2s[0]] = 2
    inv_idxs[v_opps[0]] = 3
    inv_idxs[12] = 4

    A = anchor_size
    # idxs_k[k, i, j] = inv_idxs[trace_idxv_rot[j, k]]   (values in [0, 5))
    idxs_k = np.broadcast_to(inv_idxs[trace_idxv_rot.T][:, None, :],
                             (kernel_size, A, A)).astype(np.int32)
    # idxs_a[k, i, j] = trace_idx_rot[j, i]              (values in [0, 12))
    idxs_a = np.broadcast_to(trace_idx_rot.T[None, :, :],
                             (kernel_size, A, A)).astype(np.int32)

    # nn.init.xavier_normal_(W, gain=calculate_gain('relu')) == std*N(0,1)
    fan_in = dim_in * 5 * A
    fan_out = dim_out * 5 * A
    std = np.sqrt(2.0) * np.sqrt(2.0 / (fan_in + fan_out))
    W = std * jax.random.normal(key, (dim_out, dim_in, 5, A), dtype=jnp.float32)
    return W, jnp.asarray(np.ascontiguousarray(idxs_k)), \
           jnp.asarray(np.ascontiguousarray(idxs_a))


def gather_weights(W, idxs_k, idxs_a):
    """Replicates the two torch.gather calls in forward(). Returns (d,c,13,a,a)."""
    D, C, _, A = W.shape
    K = idxs_k.shape[0]
    W_exp = jnp.broadcast_to(W[..., None], (D, C, 5, A, A))
    ik = jnp.broadcast_to(idxs_k[None, None], (D, C, K, A, A))
    ia = jnp.broadcast_to(idxs_a[None, None], (D, C, K, A, A))
    W1 = jnp.take_along_axis(W_exp, ik, axis=2)   # gather over the 5-dim
    W2 = jnp.take_along_axis(W1, ia, axis=3)      # gather over the anchor dim
    return W2                                     # 'dckar'


# ----------------------------------------------------------------------------
# Helpers
# ----------------------------------------------------------------------------
def _round_up(v, m):
    return ((v + m - 1) // m) * m


def _cdiv(a_, b_):
    return (a_ + b_ - 1) // b_


# ----------------------------------------------------------------------------
# Weight prep (hoisted out of the per-call hot path: run once, reuse)
# ----------------------------------------------------------------------------
def prepare_wm(W, idxs_k, idxs_a, compute_dtype=jnp.bfloat16):
    """Gather (d,c,5,a)->(d,c,13,a,a), flatten to Wm_T = (d*a, c*k*a),
    zero-pad the contraction axis K to a multiple of 128, cast to the MXU
    compute dtype.  Call once per parameter set (not per forward)."""
    Wg = gather_weights(W, idxs_k, idxs_a)                    # (d,c,k,a,r)
    d, c, k, a, r = Wg.shape
    K = c * k * a
    K_pad = _round_up(K, 128)
    Wm_T = jnp.transpose(Wg, (0, 4, 1, 2, 3)).reshape(d * r, K)   # rows = (d, r)
    if K_pad != K:
        Wm_T = jnp.pad(Wm_T, ((0, 0), (0, K_pad - K)))            # zero K-pad
    return Wm_T.astype(compute_dtype)


# ----------------------------------------------------------------------------
# Pallas kernel: one lane-dense MXU matmul per M-tile
# ----------------------------------------------------------------------------
def _s2conv_matmul_kernel(w_ref, x_ref, o_ref):
    # (d*a, K_pad) @ (K_pad, tm) -> (d*a, tm); bf16 operands, f32 accumulation.
    o_ref[...] = jnp.dot(w_ref[...], x_ref[...],
                         preferred_element_type=jnp.float32)


def basic_s2conv_forward(x, Wm_T, *, tm=256):
    """x: (b, c, k, p, a) float32; Wm_T: (d*a, K_pad) from prepare_wm()."""
    b, c, k, p, a = x.shape
    N, K_pad = Wm_T.shape
    d = N // a
    K = c * k * a
    assert K_pad == _round_up(K, 128)
    M = b * p

    # ---- layout plumbing: one fused XLA copy (cast + transpose + pad) ------
    # X_T[(c,k,a), (b,p)] = x[b,c,k,p,a]; cast before the transpose so the
    # relayout moves bf16 bytes, not f32.
    # TODO(synk): fold this transpose into the BlockSpec/index_map (walk x in
    # its native (b,c,k,p,a) layout and relayout in-kernel) to remove the
    # remaining HBM pass over the activations.
    X_T = jnp.transpose(x.astype(Wm_T.dtype), (1, 2, 4, 0, 3)).reshape(K, M)

    # M tile: lane-dense (multiple of 128), large, but keep >=2 tiles when
    # possible so both v7x TensorCores get work on the "parallel" axis.
    M_128 = _round_up(M, 128)
    tm_eff = min(tm, M_128)
    if M_128 >= 256 and _cdiv(M_128, tm_eff) < 2:
        tm_eff = _round_up(M_128 // 2, 128)
    M_pad = _round_up(M, tm_eff)

    pad_k, pad_m = K_pad - K, M_pad - M
    if pad_k or pad_m:
        # Zero K-pad rows (matching Wm_T columns are zero) and zero M-pad
        # lanes (sliced off below).
        X_T = jnp.pad(X_T, ((0, pad_k), (0, pad_m)))

    num_tiles = M_pad // tm_eff
    out_t = pl.pallas_call(
        _s2conv_matmul_kernel,
        out_shape=jax.ShapeDtypeStruct((N, M_pad), jnp.float32),
        grid=(num_tiles,),
        in_specs=[pl.BlockSpec((N, K_pad), lambda i: (0, 0)),       # resident W
                  pl.BlockSpec((K_pad, tm_eff), lambda i: (0, i))], # X tile
        out_specs=pl.BlockSpec((N, tm_eff), lambda i: (0, i)),
        compiler_params=pltpu.CompilerParams(
            dimension_semantics=("parallel",)),
    )(Wm_T, X_T)

    # (d*a, b*p) -> (b, d, p, a)
    # TODO(synk): at production sizes, emit (b,d,p,a) blocks directly from the
    # kernel via a 4-D out BlockSpec to skip this small output transpose.
    out = out_t[:, :M].reshape(d, a, b, p)
    return jnp.transpose(out, (2, 0, 3, 1))


if __name__ == "__main__":
    dim_in, dim_out = 4, 8
    kernel_size, anchor_size = 13, 12
    b, p = 2, 16

    key = jax.random.PRNGKey(0)
    kW, kx = jax.random.split(key)
    W, idxs_k, idxs_a = make_basic_s2conv_params(kW, dim_in, dim_out,
                                                 kernel_size, anchor_size)
    x = jax.random.normal(kx, (b, dim_in, kernel_size, p, anchor_size),
                          dtype=jnp.float32)

    Wm_T = prepare_wm(W, idxs_k, idxs_a)              # hoisted weight prep (bf16)
    fwd = jax.jit(basic_s2conv_forward)
    out = jax.block_until_ready(fwd(x, Wm_T))
    assert out.shape == (b, dim_out, p, anchor_size)

    # pure-JAX references of the PyTorch forward (same gathers + einsum)
    Wg = gather_weights(W, idxs_k, idxs_a)
    # (1) exact-match reference: same bf16-rounded operands, f32 accumulation
    ref_bf16 = jnp.einsum('dckar,bckpa->bdpr',
                          Wg.astype(jnp.bfloat16).astype(jnp.float32),
                          x.astype(jnp.bfloat16).astype(jnp.float32),
                          precision=jax.lax.Precision.HIGHEST)
    # (2) full-precision reference (looser tolerance: bf16 MXU operands)
    ref_f32 = jnp.einsum('dckar,bckpa->bdpr', Wg, x,
                         precision=jax.lax.Precision.HIGHEST)

    np.testing.assert_allclose(np.asarray(out), np.asarray(ref_bf16),
                               rtol=1e-2, atol=1e-2)
    np.testing.assert_allclose(np.asarray(out), np.asarray(ref_f32),
                               rtol=6e-2, atol=6e-2)
    print("KERNEL_OK")
</pallas_src>

<mosaic_0001>
module attributes {stable_mosaic.version = 11 : i64} {
  func.func @_s2conv_matmul_kernel(%arg0: i32, %arg1: memref<96x640xbf16, #tpu.memory_space<vmem>>, %arg2: memref<640x128xbf16, #tpu.memory_space<vmem>>, %arg3: memref<96x128xf32, #tpu.memory_space<vmem>>) attributes {dimension_semantics = [#tpu.dimension_semantics<parallel>], iteration_bounds = array<i64: 1>, scalar_prefetch = 0 : i64, scratch_operands = 0 : i64, tpu.core_type = #tpu.core_type<tc>, window_params = [{pipeline_mode = #tpu.pipeline_mode<synchronous>, transform_indices = @transform_0, window_bounds = array<i64: 96, 640>}, {transform_indices = @transform_1, window_bounds = array<i64: 640, 128>}, {transform_indices = @transform_2, window_bounds = array<i64: 96, 128>}]} {
    %c0 = arith.constant 0 : index
    %c0_0 = arith.constant 0 : index
    %0 = vector.load %arg1[%c0, %c0_0] : memref<96x640xbf16, #tpu.memory_space<vmem>>, vector<96x640xbf16>
    %c0_1 = arith.constant 0 : index
    %c0_2 = arith.constant 0 : index
    %1 = vector.load %arg2[%c0_1, %c0_2] : memref<640x128xbf16, #tpu.memory_space<vmem>>, vector<640x128xbf16>
    %cst = arith.constant dense<0.000000e+00> : vector<96x128xf32>
    %2 = tpu.matmul %0, %1, %cst {dimension_numbers = #tpu.dot_dimension_numbers<[1], [0], [0], [1], [0, 0, 1, 1], [], []>} : vector<96x640xbf16>, vector<640x128xbf16>, vector<96x128xf32> -> vector<96x128xf32>
    %c0_3 = arith.constant 0 : index
    %c0_4 = arith.constant 0 : index
    %3 = vector.load %arg3[%c0_3, %c0_4] : memref<96x128xf32, #tpu.memory_space<vmem>>, vector<96x128xf32>
    tpu.vector_store %arg3[%c0_3, %c0_4], %2 {strides = array<i32>} : memref<96x128xf32, #tpu.memory_space<vmem>>, vector<96x128xf32>,
    return
  }
  func.func @transform_0(%arg0: i32) -> (i32, i32) {
    %c0_i32 = arith.constant 0 : i32
    %c0_i32_0 = arith.constant 0 : i32
    %c0_i32_1 = arith.constant 0 : i32
    return %c0_i32, %c0_i32_0 : i32, i32
  }
  func.func @transform_1(%arg0: i32) -> (i32, i32) {
    %c0_i32 = arith.constant 0 : i32
    %c0_i32_0 = arith.constant 0 : i32
    return %c0_i32, %arg0 : i32, i32
  }
  func.func @transform_2(%arg0: i32) -> (i32, i32) {
    %c0_i32 = arith.constant 0 : i32
    %c0_i32_0 = arith.constant 0 : i32
    return %c0_i32, %arg0 : i32, i32
  }
}

</mosaic_0001>

<llo_original>
// kernel: basic_s2conv_forward.1
$region0: #{basic_s2conv_forward.1}
  #allocation0 [shape = 'u32[]', space=smem, size = 0x4, offset = 0x4, fixed_abs, tag = 'smem constant byte address 0x4 - core index']
  #allocation1 [shape = 'u32[144,128]{1,0:T(1,128)}', space=vmem, size = 0x12000, scoped, tag = 'internal scratch']
  %s0 = inlined_call_operand.vmem [shape: bf16[96,640], index: 0, kind: input, shape index: {}]
  %s1 = inlined_call_operand.vmem [shape: bf16[640,128], index: 1, kind: input, shape index: {}]
  %s2 = inlined_call_operand.vmem [shape: f32[96,128], index: 2, kind: output, shape index: {}]
  %s3 = sld [smem:[#allocation0]]
  $region18: #{basic_s2conv_forward.1} parent=0
    _
  %s5 = ssub.s32 1, %s3
  %s6 = scalar_select 0, %s5, %s3
  // Predicated region
  $region2: #{basic_s2conv_forward.1} parent=0 // pred_check
    _
  $region3: #{basic_s2conv_forward.1} parent=0 // pred_check_branch
    %8 = sbr.rel (0) target = $region5
  $region4: #{basic_s2conv_forward.1} parent=0 // pred_region
    _
  $region5: #{basic_s2conv_forward.1} parent=0 // pred_fallthru
    _
  // Predicated region
  $region6: #{basic_s2conv_forward.1} parent=0 // pred_check
    _
  $region7: #{basic_s2conv_forward.1} parent=0 // pred_check_branch
    %10 = sbr.rel (0) target = $region9
  $region8: #{basic_s2conv_forward.1} parent=0 // pred_region
    _
  $region9: #{basic_s2conv_forward.1} parent=0 // pred_fallthru
    _
  %v12 = vld [vmem:[%s0] sm:$0xff]
  %v13 = vld [vmem:[%s0 + $0x8] sm:$0xff]
  %v14 = vld [vmem:[%s0 + $0x10] sm:$0xf]
  %v15 = vld [vmem:[%s0 + $0x14] sm:$0xff]
  %v16 = vld [vmem:[%s0 + $0x1c] sm:$0xff]
  %v17 = vld [vmem:[%s0 + $0x24] sm:$0xf]
  %v18 = vld [vmem:[%s0 + $0x28] sm:$0xff]
  %v19 = vld [vmem:[%s0 + $0x30] sm:$0xff]
  %v20 = vld [vmem:[%s0 + $0x38] sm:$0xf]
  %v21 = vld [vmem:[%s0 + $0x3c] sm:$0xff]
  %v22 = vld [vmem:[%s0 + $0x44] sm:$0xff]
  %v23 = vld [vmem:[%s0 + $0x4c] sm:$0xf]
  %v24 = vld [vmem:[%s0 + $0x50] sm:$0xff]
  %v25 = vld [vmem:[%s0 + $0x58] sm:$0xff]
  %v26 = vld [vmem:[%s0 + $0x60] sm:$0xf]
  %v27 = vld [vmem:[%s0 + $0x64] sm:$0xff]
  %v28 = vld [vmem:[%s0 + $0x6c] sm:$0xff]
  %v29 = vld [vmem:[%s0 + $0x74] sm:$0xf]
  %v30 = vld [vmem:[%s0 + $0x78] sm:$0xff]
  %v31 = vld [vmem:[%s0 + $0x80] sm:$0xff]
  %v32 = vld [vmem:[%s0 + $0x88] sm:$0xf]
  %v33 = vld [vmem:[%s0 + $0x8c] sm:$0xff]
  %v34 = vld [vmem:[%s0 + $0x94] sm:$0xff]
  %v35 = vld [vmem:[%s0 + $0x9c] sm:$0xf]
  %v36 = vld [vmem:[%s0 + $0xa0] sm:$0xff]
  %v37 = vld [vmem:[%s0 + $0xa8] sm:$0xff]
  %v38 = vld [vmem:[%s0 + $0xb0] sm:$0xf]
  %v39 = vld [vmem:[%s0 + $0xb4] sm:$0xff]
  %v40 = vld [vmem:[%s0 + $0xbc] sm:$0xff]
  %v41 = vld [vmem:[%s0 + $0xc4] sm:$0xf]
  %v42 = vld [vmem:[%s0 + $0xc8] sm:$0xff]
  %v43 = vld [vmem:[%s0 + $0xd0] sm:$0xff]
  %v44 = vld [vmem:[%s0 + $0xd8] sm:$0xf]
  %v45 = vld [vmem:[%s0 + $0xdc] sm:$0xff]
  %v46 = vld [vmem:[%s0 + $0xe4] sm:$0xff]
  %v47 = vld [vmem:[%s0 + $0xec] sm:$0xf]
  %v48 = vld [vmem:[%s1] sm:$0xf]
  %v49 = vld [vmem:[%s1 + $0x4] sm:$0xf]
  %v50 = vld [vmem:[%s1 + $0x8] sm:$0xf]
  %v51 = vld [vmem:[%s1 + $0xc] sm:$0xf]
  %v52 = vld [vmem:[%s1 + $0x10] sm:$0xf]
  %v53 = vld [vmem:[%s1 + $0x14] sm:$0xf]
  %v54 = vld [vmem:[%s1 + $0x18] sm:$0xf]
  %v55 = vld [vmem:[%s1 + $0x1c] sm:$0xf]
  %v56 = vld [vmem:[%s1 + $0x20] sm:$0xf]
  %v57 = vld [vmem:[%s1 + $0x24] sm:$0xf]
  %v58 = vld [vmem:[%s1 + $0x28] sm:$0xf]
  %v59 = vld [vmem:[%s1 + $0x2c] sm:$0xf]
  %v60 = vld [vmem:[%s1 + $0x30] sm:$0xf]
  %v61 = vld [vmem:[%s1 + $0x34] sm:$0xf]
  %v62 = vld [vmem:[%s1 + $0x38] sm:$0xf]
  %v63 = vld [vmem:[%s1 + $0x3c] sm:$0xf]
  %v64 = vld [vmem:[%s1 + $0x40] sm:$0xf]
  %v65 = vld [vmem:[%s1 + $0x44] sm:$0xf]
  %v66 = vld [vmem:[%s1 + $0x48] sm:$0xf]
  %v67 = vld [vmem:[%s1 + $0x4c] sm:$0xf]
  %v68 = vld [vmem:[%s1 + $0x50] sm:$0xf]
  %v69 = vld [vmem:[%s1 + $0x54] sm:$0xf]
  %v70 = vld [vmem:[%s1 + $0x58] sm:$0xf]
  %v71 = vld [vmem:[%s1 + $0x5c] sm:$0xf]
  %v72 = vld [vmem:[%s1 + $0x60] sm:$0xf]
  %v73 = vld [vmem:[%s1 + $0x64] sm:$0xf]
  %v74 = vld [vmem:[%s1 + $0x68] sm:$0xf]
  %v75 = vld [vmem:[%s1 + $0x6c] sm:$0xf]
  %v76 = vld [vmem:[%s1 + $0x70] sm:$0xf]
  %v77 = vld [vmem:[%s1 + $0x74] sm:$0xf]
  %v78 = vld [vmem:[%s1 + $0x78] sm:$0xf]
  %v79 = vld [vmem:[%s1 + $0x7c] sm:$0xf]
  %v80 = vld [vmem:[%s1 + $0x80] sm:$0xf]
  %v81 = vld [vmem:[%s1 + $0x84] sm:$0xf]
  %v82 = vld [vmem:[%s1 + $0x88] sm:$0xf]
  %v83 = vld [vmem:[%s1 + $0x8c] sm:$0xf]
  %v84 = vld [vmem:[%s1 + $0x90] sm:$0xf]
  %v85 = vld [vmem:[%s1 + $0x94] sm:$0xf]
  %v86 = vld [vmem:[%s1 + $0x98] sm:$0xf]
  %v87 = vld [vmem:[%s1 + $0x9c] sm:$0xf]
  %v88 = vld [vmem:[%s1 + $0xa0] sm:$0xf]
  %v89 = vld [vmem:[%s1 + $0xa4] sm:$0xf]
  %v90 = vld [vmem:[%s1 + $0xa8] sm:$0xf]
  %v91 = vld [vmem:[%s1 + $0xac] sm:$0xf]
  %v92 = vld [vmem:[%s1 + $0xb0] sm:$0xf]
  %v93 = vld [vmem:[%s1 + $0xb4] sm:$0xf]
  %v94 = vld [vmem:[%s1 + $0xb8] sm:$0xf]
  %v95 = vld [vmem:[%s1 + $0xbc] sm:$0xf]
  %v96 = vld [vmem:[%s1 + $0xc0] sm:$0xf]
  %v97 = vld [vmem:[%s1 + $0xc4] sm:$0xf]
  %v98 = vld [vmem:[%s1 + $0xc8] sm:$0xf]
  %v99 = vld [vmem:[%s1 + $0xcc] sm:$0xf]
  %v100 = vld [vmem:[%s1 + $0xd0] sm:$0xf]
  %v101 = vld [vmem:[%s1 + $0xd4] sm:$0xf]
  %v102 = vld [vmem:[%s1 + $0xd8] sm:$0xf]
  %v103 = vld [vmem:[%s1 + $0xdc] sm:$0xf]
  %v104 = vld [vmem:[%s1 + $0xe0] sm:$0xf]
  %v105 = vld [vmem:[%s1 + $0xe4] sm:$0xf]
  %v106 = vld [vmem:[%s1 + $0xe8] sm:$0xf]
  %v107 = vld [vmem:[%s1 + $0xec] sm:$0xf]
  %v108 = vld [vmem:[%s1 + $0xf0] sm:$0xf]
  %v109 = vld [vmem:[%s1 + $0xf4] sm:$0xf]
  %v110 = vld [vmem:[%s1 + $0xf8] sm:$0xf]
  %v111 = vld [vmem:[%s1 + $0xfc] sm:$0xf]
  %v112 = vld [vmem:[%s1 + $0x100] sm:$0xf]
  %v113 = vld [vmem:[%s1 + $0x104] sm:$0xf]
  %v114 = vld [vmem:[%s1 + $0x108] sm:$0xf]
  %v115 = vld [vmem:[%s1 + $0x10c] sm:$0xf]
  %v116 = vld [vmem:[%s1 + $0x110] sm:$0xf]
  %v117 = vld [vmem:[%s1 + $0x114] sm:$0xf]
  %v118 = vld [vmem:[%s1 + $0x118] sm:$0xf]
  %v119 = vld [vmem:[%s1 + $0x11c] sm:$0xf]
  %v120 = vld [vmem:[%s1 + $0x120] sm:$0xf]
  %v121 = vld [vmem:[%s1 + $0x124] sm:$0xf]
  %v122 = vld [vmem:[%s1 + $0x128] sm:$0xf]
  %v123 = vld [vmem:[%s1 + $0x12c] sm:$0xf]
  %v124 = vld [vmem:[%s1 + $0x130] sm:$0xf]
  %v125 = vld [vmem:[%s1 + $0x134] sm:$0xf]
  %v126 = vld [vmem:[%s1 + $0x138] sm:$0xf]
  %v127 = vld [vmem:[%s1 + $0x13c] sm:$0xf]
  %v164 = vunpack.c.l.b16 %v12
  %v165 = vunpack.c.h.b16 %v12
  %v166 = vunpack.c.l.b16 %v13
  %v167 = vunpack.c.h.b16 %v13
  %v168 = vunpack.c.l.b16 %v14
  %v169 = vunpack.c.l.b16 %v15
  %v170 = vunpack.c.h.b16 %v15
  %v171 = vunpack.c.l.b16 %v16
  %v172 = vunpack.c.h.b16 %v16
  %v173 = vunpack.c.l.b16 %v17
  %v174 = vunpack.c.l.b16 %v18
  %v175 = vunpack.c.h.b16 %v18
  %v176 = vunpack.c.l.b16 %v19
  %v177 = vunpack.c.h.b16 %v19
  %v178 = vunpack.c.l.b16 %v20
  %v179 = vunpack.c.l.b16 %v21
  %v180 = vunpack.c.h.b16 %v21
  %v181 = vunpack.c.l.b16 %v22
  %v182 = vunpack.c.h.b16 %v22
  %v183 = vunpack.c.l.b16 %v23
  %v184 = vunpack.c.l.b16 %v24
  %v185 = vunpack.c.h.b16 %v24
  %v186 = vunpack.c.l.b16 %v25
  %v187 = vunpack.c.h.b16 %v25
  %v188 = vunpack.c.l.b16 %v26
  %v189 = vunpack.c.l.b16 %v27
  %v190 = vunpack.c.h.b16 %v27
  %v191 = vunpack.c.l.b16 %v28
  %v192 = vunpack.c.h.b16 %v28
  %v193 = vunpack.c.l.b16 %v29
  %v194 = vunpack.c.l.b16 %v30
  %v195 = vunpack.c.h.b16 %v30
  %v196 = vunpack.c.l.b16 %v31
  %v197 = vunpack.c.h.b16 %v31
  %v198 = vunpack.c.l.b16 %v32
  %v199 = vunpack.c.l.b16 %v33
  %v200 = vunpack.c.h.b16 %v33
  %v201 = vunpack.c.l.b16 %v34
  %v202 = vunpack.c.h.b16 %v34
  %v203 = vunpack.c.l.b16 %v35
  %v204 = vunpack.c.l.b16 %v36
  %v205 = vunpack.c.h.b16 %v36
  %v206 = vunpack.c.l.b16 %v37
  %v207 = vunpack.c.h.b16 %v37
  %v208 = vunpack.c.l.b16 %v38
  %v209 = vunpack.c.l.b16 %v39
  %v210 = vunpack.c.h.b16 %v39
  %v211 = vunpack.c.l.b16 %v40
  %v212 = vunpack.c.h.b16 %v40
  %v213 = vunpack.c.l.b16 %v41
  %v214 = vunpack.c.l.b16 %v42
  %v215 = vunpack.c.h.b16 %v42
  %v216 = vunpack.c.l.b16 %v43
  %v217 = vunpack.c.h.b16 %v43
  %v218 = vunpack.c.l.b16 %v44
  %v219 = vunpack.c.l.b16 %v45
  %v220 = vunpack.c.h.b16 %v45
  %v221 = vunpack.c.l.b16 %v46
  %v222 = vunpack.c.h.b16 %v46
  %v223 = vunpack.c.l.b16 %v47
  %v224 = vpack.c.b16 %v169, %v164
  %v225 = vpack.c.b16 %v170, %v165
  %v226 = vpack.c.b16 %v171, %v166
  %v227 = vpack.c.b16 %v172, %v167
  %v228 = vpack.c.b16 %v173, %v168
  %v229 = vpack.c.b16 %v179, %v174
  %v230 = vpack.c.b16 %v180, %v175
  %v231 = vpack.c.b16 %v181, %v176
  %v232 = vpack.c.b16 %v182, %v177
  %v233 = vpack.c.b16 %v183, %v178
  %v234 = vpack.c.b16 %v189, %v184
  %v235 = vpack.c.b16 %v190, %v185
  %v236 = vpack.c.b16 %v191, %v186
  %v237 = vpack.c.b16 %v192, %v187
  %v238 = vpack.c.b16 %v193, %v188
  %v239 = vpack.c.b16 %v199, %v194
  %v240 = vpack.c.b16 %v200, %v195
  %v241 = vpack.c.b16 %v201, %v196
  %v242 = vpack.c.b16 %v202, %v197
  %v243 = vpack.c.b16 %v203, %v198
  %v244 = vpack.c.b16 %v209, %v204
  %v245 = vpack.c.b16 %v210, %v205
  %v246 = vpack.c.b16 %v211, %v206
  %v247 = vpack.c.b16 %v212, %v207
  %v248 = vpack.c.b16 %v213, %v208
  %v249 = vpack.c.b16 %v219, %v214
  %v250 = vpack.c.b16 %v220, %v215
  %v251 = vpack.c.b16 %v221, %v216
  %v252 = vpack.c.b16 %v222, %v217
  %v253 = vpack.c.b16 %v223, %v218
  %v364 = vunpack.c.l.b16 %v48
  %v365 = vunpack.c.l.b16 %v49
  %v366 = vunpack.c.l.b16 %v50
  %v367 = vunpack.c.l.b16 %v51
  %v368 = vunpack.c.l.b16 %v52
  %v369 = vunpack.c.l.b16 %v53
  %v370 = vunpack.c.l.b16 %v54
  %v371 = vunpack.c.l.b16 %v55
  %v372 = vunpack.c.l.b16 %v56
  %v373 = vunpack.c.l.b16 %v57
  %v374 = vunpack.c.l.b16 %v58
  %v375 = vunpack.c.l.b16 %v59
  %v376 = vunpack.c.l.b16 %v60
  %v377 = vunpack.c.l.b16 %v61
  %v378 = vunpack.c.l.b16 %v62
  %v379 = vunpack.c.l.b16 %v63
  %v380 = vunpack.c.l.b16 %v64
  %v381 = vunpack.c.l.b16 %v65
  %v382 = vunpack.c.l.b16 %v66
  %v383 = vunpack.c.l.b16 %v67
  %v384 = vunpack.c.l.b16 %v68
  %v385 = vunpack.c.l.b16 %v69
  %v386 = vunpack.c.l.b16 %v70
  %v387 = vunpack.c.l.b16 %v71
  %v388 = vunpack.c.l.b16 %v72
  %v389 = vunpack.c.l.b16 %v73
  %v390 = vunpack.c.l.b16 %v74
  %v391 = vunpack.c.l.b16 %v75
  %v392 = vunpack.c.l.b16 %v76
  %v393 = vunpack.c.l.b16 %v77
  %v394 = vunpack.c.l.b16 %v78
  %v395 = vunpack.c.l.b16 %v79
  %v396 = vunpack.c.l.b16 %v80
  %v397 = vunpack.c.l.b16 %v81
  %v398 = vunpack.c.l.b16 %v82
  %v399 = vunpack.c.l.b16 %v83
  %v400 = vunpack.c.l.b16 %v84
  %v401 = vunpack.c.l.b16 %v85
  %v402 = vunpack.c.l.b16 %v86
  %v403 = vunpack.c.l.b16 %v87
  %v404 = vunpack.c.l.b16 %v88
  %v405 = vunpack.c.l.b16 %v89
  %v406 = vunpack.c.l.b16 %v90
  %v407 = vunpack.c.l.b16 %v91
  %v408 = vunpack.c.l.b16 %v92
  %v409 = vunpack.c.l.b16 %v93
  %v410 = vunpack.c.l.b16 %v94
  %v411 = vunpack.c.l.b16 %v95
  %v412 = vunpack.c.l.b16 %v96
  %v413 = vunpack.c.l.b16 %v97
  %v414 = vunpack.c.l.b16 %v98
  %v415 = vunpack.c.l.b16 %v99
  %v416 = vunpack.c.l.b16 %v100
  %v417 = vunpack.c.l.b16 %v101
  %v418 = vunpack.c.l.b16 %v102
  %v419 = vunpack.c.l.b16 %v103
  %v420 = vunpack.c.l.b16 %v104
  %v421 = vunpack.c.l.b16 %v105
  %v422 = vunpack.c.l.b16 %v106
  %v423 = vunpack.c.l.b16 %v107
  %v424 = vunpack.c.l.b16 %v108
  %v425 = vunpack.c.l.b16 %v109
  %v426 = vunpack.c.l.b16 %v110
  %v427 = vunpack.c.l.b16 %v111
  %v428 = vunpack.c.l.b16 %v112
  %v429 = vunpack.c.l.b16 %v113
  %v430 = vunpack.c.l.b16 %v114
  %v431 = vunpack.c.l.b16 %v115
  %v432 = vunpack.c.l.b16 %v116
  %v433 = vunpack.c.l.b16 %v117
  %v434 = vunpack.c.l.b16 %v118
  %v435 = vunpack.c.l.b16 %v119
  %v436 = vunpack.c.l.b16 %v120
  %v437 = vunpack.c.l.b16 %v121
  %v438 = vunpack.c.l.b16 %v122
  %v439 = vunpack.c.l.b16 %v123
  %v440 = vunpack.c.l.b16 %v124
  %v441 = vunpack.c.l.b16 %v125
  %v442 = vunpack.c.l.b16 %v126
  %v443 = vunpack.c.l.b16 %v127
  %v444 = vpack.c.b16 %v365, %v364
  %v445 = vpack.c.b16 %v367, %v366
  %v446 = vpack.c.b16 %v369, %v368
  %v447 = vpack.c.b16 %v371, %v370
  %v448 = vpack.c.b16 %v373, %v372
  %v449 = vpack.c.b16 %v375, %v374
  %v450 = vpack.c.b16 %v377, %v376
  %v451 = vpack.c.b16 %v379, %v378
  %v452 = vpack.c.b16 %v381, %v380
  %v453 = vpack.c.b16 %v383, %v382
  %v454 = vpack.c.b16 %v385, %v384
  %v455 = vpack.c.b16 %v387, %v386
  %v456 = vpack.c.b16 %v389, %v388
  %v457 = vpack.c.b16 %v391, %v390
  %v458 = vpack.c.b16 %v393, %v392
  %v459 = vpack.c.b16 %v395, %v394
  %v460 = vpack.c.b16 %v397, %v396
  %v461 = vpack.c.b16 %v399, %v398
  %v462 = vpack.c.b16 %v401, %v400
  %v463 = vpack.c.b16 %v403, %v402
  %v464 = vpack.c.b16 %v405, %v404
  %v465 = vpack.c.b16 %v407, %v406
  %v466 = vpack.c.b16 %v409, %v408
  %v467 = vpack.c.b16 %v411, %v410
  %v468 = vpack.c.b16 %v413, %v412
  %v469 = vpack.c.b16 %v415, %v414
  %v470 = vpack.c.b16 %v417, %v416
  %v471 = vpack.c.b16 %v419, %v418
  %v472 = vpack.c.b16 %v421, %v420
  %v473 = vpack.c.b16 %v423, %v422
  %v474 = vpack.c.b16 %v425, %v424
  %v475 = vpack.c.b16 %v427, %v426
  %v476 = vpack.c.b16 %v429, %v428
  %v477 = vpack.c.b16 %v431, %v430
  %v478 = vpack.c.b16 %v433, %v432
  %v479 = vpack.c.b16 %v435, %v434
  %v480 = vpack.c.b16 %v437, %v436
  %v481 = vpack.c.b16 %v439, %v438
  %v482 = vpack.c.b16 %v441, %v440
  %v483 = vpack.c.b16 %v443, %v442
  %524 = vmatprep.subr.bf16.mxu0 0
  %525 = vmatpush1.bf16.msra.mxu0 %v444
  %526 = vmatprep.subr.bf16.mxu0 0
  %527 = vmatpush1.bf16.msra.mxu0 %v445
  %528 = vmatprep.subr.bf16.mxu0 0
  %529 = vmatpush1.bf16.msra.mxu0 %v446
  %530 = vmatprep.subr.bf16.mxu0 0
  %531 = vmatpush1.bf16.msra.mxu0 %v447
  %532 = vmatprep.subr.bf16.mxu0 0
  %533 = vmatpush1.bf16.msra.mxu0 %v448
  %534 = vmatprep.subr.bf16.mxu0 0
  %535 = vmatpush1.bf16.msra.mxu0 %v449
  %536 = vmatprep.subr.bf16.mxu0 0
  %537 = vmatpush1.bf16.msra.mxu0 %v450
  %538 = vmatprep.subr.bf16.mxu0 0
  %539 = vmatpush1.bf16.msra.mxu0 %v451
  %540 = vmatprep.subr.bf16.mxu0 0
  %541 = vmatpush1.bf16.msra.mxu0 %v452
  %542 = vmatprep.subr.bf16.mxu0 0
  %543 = vmatpush1.bf16.msra.mxu0 %v453
  %544 = vmatprep.subr.bf16.mxu0 0
  %545 = vmatpush1.bf16.msra.mxu0 %v454
  %546 = vmatprep.subr.bf16.mxu0 0
  %547 = vmatpush1.bf16.msra.mxu0 %v455
  %548 = vmatprep.subr.bf16.mxu0 0
  %549 = vmatpush1.bf16.msra.mxu0 %v456
  %550 = vmatprep.subr.bf16.mxu0 0
  %551 = vmatpush1.bf16.msra.mxu0 %v457
  %552 = vmatprep.subr.bf16.mxu0 0
  %553 = vmatpush1.bf16.msra.mxu0 %v458
  %554 = vmatprep.subr.bf16.mxu0 0
  %555 = vmatpush1.bf16.msra.mxu0 %v459
  %556 = vmatprep.mubr.bf16.mxu0 %v225
  %557 = vmatmul.mubr.bf16.gmra.mrb[0].mxu0 %v224
  %v558 = vpop.f32.mrb[0].mxu0
  %v559 = vadd.f32 0.0, %v558
  %v560 = vpop.f32.mrb[0].mxu0
  %v561 = vpop.f32.mrb[0].mxu0
  %v562 = vadd.f32 0.0, %v561
  %v563 = vpop.f32.mrb[0].mxu0
  %564 = vmatprep.mubr.bf16.mxu0 %v230
  %565 = vmatmul.mubr.bf16.gmra.mrb[0].mxu0 %v229
  %v566 = vpop.f32.mrb[0].mxu0
  %v567 = vadd.f32 0.0, %v566
  %v568 = vpop.f32.mrb[0].mxu0
  %v569 = vpop.f32.mrb[0].mxu0
  %v570 = vadd.f32 0.0, %v569
  %v571 = vpop.f32.mrb[0].mxu0
  %572 = vmatprep.mubr.bf16.mxu0 %v235
  %573 = vmatmul.mubr.bf16.gmra.mrb[0].mxu0 %v234
  %v574 = vpop.f32.mrb[0].mxu0
  %v575 = vadd.f32 0.0, %v574
  %v576 = vpop.f32.mrb[0].mxu0
  %v577 = vpop.f32.mrb[0].mxu0
  %v578 = vadd.f32 0.0, %v577
  %v579 = vpop.f32.mrb[0].mxu0
  %580 = vmatprep.mubr.bf16.mxu0 %v240
  %581 = vmatmul.mubr.bf16.gmra.mrb[0].mxu0 %v239
  %v582 = vpop.f32.mrb[0].mxu0
  %v583 = vadd.f32 0.0, %v582
  %v584 = vpop.f32.mrb[0].mxu0
  %v585 = vpop.f32.mrb[0].mxu0
  %v586 = vadd.f32 0.0, %v585
  %v587 = vpop.f32.mrb[0].mxu0
  %588 = vmatprep.mubr.bf16.mxu0 %v245
  %589 = vmatmul.mubr.bf16.gmra.mrb[0].mxu0 %v244
  %v590 = vpop.f32.mrb[0].mxu0
  %v591 = vadd.f32 0.0, %v590
  %v592 = vpop.f32.mrb[0].mxu0
  %v593 = vpop.f32.mrb[0].mxu0
  %v594 = vadd.f32 0.0, %v593
  %v595 = vpop.f32.mrb[0].mxu0
  %596 = vmatprep.mubr.bf16.mxu0 %v250
  %597 = vmatmul.mubr.bf16.gmra.mrb[0].mxu0 %v249
  %v598 = vpop.f32.mrb[0].mxu0
  %v599 = vadd.f32 0.0, %v598
  %v600 = vpop.f32.mrb[0].mxu0
  %v601 = vpop.f32.mrb[0].mxu0
  %v602 = vadd.f32 0.0, %v601
  %v603 = vpop.f32.mrb[0].mxu0
  %604 = vdwg.mxu0
  %605 = vmatprep.subr.bf16.mxu0 0
  %606 = vmatpush1.bf16.msra.mxu0 %v460
  %607 = vmatprep.subr.bf16.mxu0 0
  %608 = vmatpush1.bf16.msra.mxu0 %v461
  %609 = vmatprep.subr.bf16.mxu0 0
  %610 = vmatpush1.bf16.msra.mxu0 %v462
  %611 = vmatprep.subr.bf16.mxu0 0
  %612 = vmatpush1.bf16.msra.mxu0 %v463
  %613 = vmatprep.subr.bf16.mxu0 0
  %614 = vmatpush1.bf16.msra.mxu0 %v464
  %615 = vmatprep.subr.bf16.mxu0 0
  %616 = vmatpush1.bf16.msra.mxu0 %v465
  %617 = vmatprep.subr.bf16.mxu0 0
  %618 = vmatpush1.bf16.msra.mxu0 %v466
  %619 = vmatprep.subr.bf16.mxu0 0
  %620 = vmatpush1.bf16.msra.mxu0 %v467
  %621 = vmatprep.subr.bf16.mxu0 0
  %622 = vmatpush1.bf16.msra.mxu0 %v468
  %623 = vmatprep.subr.bf16.mxu0 0
  %624 = vmatpush1.bf16.msra.mxu0 %v469
  %625 = vmatprep.subr.bf16.mxu0 0
  %626 = vmatpush1.bf16.msra.mxu0 %v470
  %627 = vmatprep.subr.bf16.mxu0 0
  %628 = vmatpush1.bf16.msra.mxu0 %v471
  %629 = vmatprep.subr.bf16.mxu0 0
  %630 = vmatpush1.bf16.msra.mxu0 %v472
  %631 = vmatprep.subr.bf16.mxu0 0
  %632 = vmatpush1.bf16.msra.mxu0 %v473
  %633 = vmatprep.subr.bf16.mxu0 0
  %634 = vmatpush1.bf16.msra.mxu0 %v474
  %635 = vmatprep.subr.bf16.mxu0 0
  %636 = vmatpush1.bf16.msra.mxu0 %v475
  %637 = vmatprep.mubr.bf16.mxu0 %v227
  %638 = vmatmul.mubr.bf16.gmra.mrb[0].mxu0 %v226
  %v639 = vpop.f32.mrb[0].mxu0
  %v640 = vadd.f32 %v559, %v639
  %v641 = vpop.f32.mrb[0].mxu0
  %v642 = vpop.f32.mrb[0].mxu0
  %v643 = vadd.f32 %v562, %v642
  %v644 = vpop.f32.mrb[0].mxu0
  %645 = vmatprep.mubr.bf16.mxu0 %v232
  %646 = vmatmul.mubr.bf16.gmra.mrb[0].mxu0 %v231
  %v647 = vpop.f32.mrb[0].mxu0
  %v648 = vadd.f32 %v567, %v647
  %v649 = vpop.f32.mrb[0].mxu0
  %v650 = vpop.f32.mrb[0].mxu0
  %v651 = vadd.f32 %v570, %v650
  %v652 = vpop.f32.mrb[0].mxu0
  %653 = vmatprep.mubr.bf16.mxu0 %v237
  %654 = vmatmul.mubr.bf16.gmra.mrb[0].mxu0 %v236
  %v655 = vpop.f32.mrb[0].mxu0
  %v656 = vadd.f32 %v575, %v655
  %v657 = vpop.f32.mrb[0].mxu0
  %v658 = vpop.f32.mrb[0].mxu0
  %v659 = vadd.f32 %v578, %v658
  %v660 = vpop.f32.mrb[0].mxu0
  %661 = vmatprep.mubr.bf16.mxu0 %v242
  %662 = vmatmul.mubr.bf16.gmra.mrb[0].mxu0 %v241
  %v663 = vpop.f32.mrb[0].mxu0
  %v664 = vadd.f32 %v583, %v663
  %v665 = vpop.f32.mrb[0].mxu0
  %v666 = vpop.f32.mrb[0].mxu0
  %v667 = vadd.f32 %v586, %v666
  %v668 = vpop.f32.mrb[0].mxu0
  %669 = vmatprep.mubr.bf16.mxu0 %v247
  %670 = vmatmul.mubr.bf16.gmra.mrb[0].mxu0 %v246
  %v671 = vpop.f32.mrb[0].mxu0
  %v672 = vadd.f32 %v591, %v671
  %v673 = vpop.f32.mrb[0].mxu0
  %v674 = vpop.f32.mrb[0].mxu0
  %v675 = vadd.f32 %v594, %v674
  %v676 = vpop.f32.mrb[0].mxu0
  %677 = vmatprep.mubr.bf16.mxu0 %v252
  %678 = vmatmul.mubr.bf16.gmra.mrb[0].mxu0 %v251
  %v679 = vpop.f32.mrb[0].mxu0
  %v680 = vadd.f32 %v599, %v679
  %v681 = vpop.f32.mrb[0].mxu0
  %v682 = vpop.f32.mrb[0].mxu0
  %v683 = vadd.f32 %v602, %v682
  %v684 = vpop.f32.mrb[0].mxu0
  %685 = vdwg.mxu0
  %686 = vmatprep.subr.bf16.mxu0 0
  %687 = vmatpush1.bf16.msra.mxu0 %v476
  %688 = vmatprep.subr.bf16.mxu0 0
  %689 = vmatpush1.bf16.msra.mxu0 %v477
  %690 = vmatprep.subr.bf16.mxu0 0
  %691 = vmatpush1.bf16.msra.mxu0 %v478
  %692 = vmatprep.subr.bf16.mxu0 0
  %693 = vmatpush1.bf16.msra.mxu0 %v479
  %694 = vmatprep.subr.bf16.mxu0 0
  %695 = vmatpush1.bf16.msra.mxu0 %v480
  %696 = vmatprep.subr.bf16.mxu0 0
  %697 = vmatpush1.bf16.msra.mxu0 %v481
  %698 = vmatprep.subr.bf16.mxu0 0
  %699 = vmatpush1.bf16.msra.mxu0 %v482
  %700 = vmatprep.subr.bf16.mxu0 0
  %701 = vmatpush1.bf16.msra.mxu0 %v483
  %702 = vmatprep.subr.bf16.mxu0 0
  %703 = vmatpush1.bf16.msra.mxu0 0
  %704 = vmatprep.subr.bf16.mxu0 0
  %705 = vmatpush1.bf16.msra.mxu0 0
  %706 = vmatprep.subr.bf16.mxu0 0
  %707 = vmatpush1.bf16.msra.mxu0 0
  %708 = vmatprep.subr.bf16.mxu0 0
  %709 = vmatpush1.bf16.msra.mxu0 0
  %710 = vmatprep.subr.bf16.mxu0 0
  %711 = vmatpush1.bf16.msra.mxu0 0
  %712 = vmatprep.subr.bf16.mxu0 0
  %713 = vmatpush1.bf16.msra.mxu0 0
  %714 = vmatprep.subr.bf16.mxu0 0
  %715 = vmatpush1.bf16.msra.mxu0 0
  %716 = vmatprep.subr.bf16.mxu0 0
  %717 = vmatpush1.bf16.msra.mxu0 0
  %718 = vmatprep.mubr.bf16.mxu0 0
  %719 = vmatmul.mubr.bf16.gmra.mrb[0].mxu0 %v228
  %v720 = vpop.f32.mrb[0].mxu0
  %v721 = vadd.f32 %v640, %v720
  %v722 = vpop.f32.mrb[0].mxu0
  %v723 = vpop.f32.mrb[0].mxu0
  %v724 = vadd.f32 %v643, %v723
  %v725 = vpop.f32.mrb[0].mxu0
  %726 = vmatprep.mubr.bf16.mxu0 0
  %727 = vmatmul.mubr.bf16.gmra.mrb[0].mxu0 %v233
  %v728 = vpop.f32.mrb[0].mxu0
  %v729 = vadd.f32 %v648, %v728
  %v730 = vpop.f32.mrb[0].mxu0
  %v731 = vpop.f32.mrb[0].mxu0
  %v732 = vadd.f32 %v651, %v731
  %v733 = vpop.f32.mrb[0].mxu0
  %734 = vmatprep.mubr.bf16.mxu0 0
  %735 = vmatmul.mubr.bf16.gmra.mrb[0].mxu0 %v238
  %v736 = vpop.f32.mrb[0].mxu0
  %v737 = vadd.f32 %v656, %v736
  %v738 = vpop.f32.mrb[0].mxu0
  %v739 = vpop.f32.mrb[0].mxu0
  %v740 = vadd.f32 %v659, %v739
  %v741 = vpop.f32.mrb[0].mxu0
  %742 = vmatprep.mubr.bf16.mxu0 0
  %743 = vmatmul.mubr.bf16.gmra.mrb[0].mxu0 %v243
  %v744 = vpop.f32.mrb[0].mxu0
  %v745 = vadd.f32 %v664, %v744
  %v746 = vpop.f32.mrb[0].mxu0
  %v747 = vpop.f32.mrb[0].mxu0
  %v748 = vadd.f32 %v667, %v747
  %v749 = vpop.f32.mrb[0].mxu0
  %750 = vmatprep.mubr.bf16.mxu0 0
  %751 = vmatmul.mubr.bf16.gmra.mrb[0].mxu0 %v248
  %v752 = vpop.f32.mrb[0].mxu0
  %v753 = vadd.f32 %v672, %v752
  %v754 = vpop.f32.mrb[0].mxu0
  %v755 = vpop.f32.mrb[0].mxu0
  %v756 = vadd.f32 %v675, %v755
  %v757 = vpop.f32.mrb[0].mxu0
  %758 = vmatprep.mubr.bf16.mxu0 0
  %759 = vmatmul.mubr.bf16.gmra.mrb[0].mxu0 %v253
  %v760 = vpop.f32.mrb[0].mxu0
  %v761 = vadd.f32 %v680, %v760
  %v762 = vpop.f32.mrb[0].mxu0
  %v763 = vpop.f32.mrb[0].mxu0
  %v764 = vadd.f32 %v683, %v763
  %v765 = vpop.f32.mrb[0].mxu0
  %766 = vdwg.mxu0
  %767 = vst [vmem:[%s2] sm:$0xff] %v721
  %768 = vst [vmem:[%s2 + $0x8] sm:$0xff] %v724
  %769 = vst [vmem:[%s2 + $0x10] sm:$0xff] %v729
  %770 = vst [vmem:[%s2 + $0x18] sm:$0xff] %v732
  %771 = vst [vmem:[%s2 + $0x20] sm:$0xff] %v737
  %772 = vst [vmem:[%s2 + $0x28] sm:$0xff] %v740
  %773 = vst [vmem:[%s2 + $0x30] sm:$0xff] %v745
  %774 = vst [vmem:[%s2 + $0x38] sm:$0xff] %v748
  %775 = vst [vmem:[%s2 + $0x40] sm:$0xff] %v753
  %776 = vst [vmem:[%s2 + $0x48] sm:$0xff] %v756
  %777 = vst [vmem:[%s2 + $0x50] sm:$0xff] %v761
  %778 = vst [vmem:[%s2 + $0x58] sm:$0xff] %v764
  // Predicated region
  $region10: #{basic_s2conv_forward.1} parent=0 // pred_check
    _
  $region11: #{basic_s2conv_forward.1} parent=0 // pred_check_branch
    %780 = sbr.rel (0) target = $region13
  $region12: #{basic_s2conv_forward.1} parent=0 // pred_region
    _
  $region13: #{basic_s2conv_forward.1} parent=0 // pred_fallthru
    _
  // Predicated region
  $region14: #{basic_s2conv_forward.1} parent=0 // pred_check
    _
  $region15: #{basic_s2conv_forward.1} parent=0 // pred_check_branch
    %782 = sbr.rel (0) target = $region17
  $region16: #{basic_s2conv_forward.1} parent=0 // pred_region
    _
  $region17: #{basic_s2conv_forward.1} parent=0 // pred_fallthru
    _

</llo_original>
